<compile_context>
chip_gen: v5e
topology: v5e:2x2
jax: 0.10.0
libtpu: 0.0.40
codegen_flags: <defaults>
</compile_context>

<pallas_src>
import functools

import jax
import jax.numpy as jnp
from jax import lax
from jax.experimental import pallas as pl
from jax.experimental.pallas import tpu as pltpu

_EPS = 1e-5
_NEG_SLOPE = 0.2

# VMEM budgets (bytes).  Sized for the smallest generation (v7x: 64 MiB/TC);
# comfortable on v5e/v6e (128 MiB).
_VMEM_LIMIT = 48 * 1024 * 1024          # scoped-VMEM limit handed to Mosaic
_TILE_BUDGET = 4 * 1024 * 1024          # per-step block budget
_SINGLE_PASS_BUDGET = 36 * 1024 * 1024  # resident-image + per-step budget


def _make_fused_kernel(n_t, ts, cout, inv_count):
    """Single pass: conv + stats + in-place InstanceNorm + LeakyReLU.

    Grid = (N, n_t).  The (1, S, cout) output block is resident across the
    (arbitrary) tile axis; per-channel sum / sumsq accumulate in VMEM scratch.
    """

    def kernel(x_ref, w_ref, m_ref, o_ref, sum_ref, sq_ref):
        # x_ref : (1, TS, 8*Cin)  bf16  tap-group operand for one spatial tile
        # w_ref : (8*Cin, 2*Cp)   bf16  [.., :Cp]: dj=0 taps, [.., Cp:]: dj=1
        # m_ref : (TS, 1)         f32   validity mask (zeros the plane pad col)
        # o_ref : (1, S, Cout)    f32   resident per-image output
        # sum/sq: (1, Cp)         f32   VMEM scratch accumulators
        t = pl.program_id(1)

        @pl.when(t == 0)
        def _():
            sum_ref[...] = jnp.zeros_like(sum_ref)
            sq_ref[...] = jnp.zeros_like(sq_ref)

        # Conv: a single MXU matmul; dj=0 and dj=1 weight matrices are
        # concatenated along N so the 256-wide MXU (v6e/v7x) is filled.
        x = x_ref[0]
        accf = jnp.dot(x, w_ref[...], preferred_element_type=jnp.float32)
        cp = accf.shape[1] // 2
        acc0 = accf[:, :cp]
        acc1 = accf[:, cp:]
        # Column-offset(+1) taps: output position s needs acc1[s + 1].  Tiles
        # span whole output rows (TS % Ws == 0), so the single wrapped element
        # lands in the plane-pad column, which the mask zeroes anyway.
        acc = acc0 + pltpu.roll(acc1, ts - 1, 0)
        acc = acc * m_ref[...]

        sum_ref[...] += jnp.sum(acc, axis=0, keepdims=True)
        sq_ref[...] += jnp.sum(acc * acc, axis=0, keepdims=True)

        if n_t == 1:
            o_ref[0] = acc[:, :cout]
        else:
            start = pl.multiple_of(t * ts, 8)
            o_ref[0, pl.ds(start, ts), :] = acc[:, :cout]

        @pl.when(t == n_t - 1)
        def _():
            # TODO(synk): E[x^2]-mean^2 can cancel for near-constant channels;
            # fine for typical activations.
            mean = sum_ref[...] * inv_count
            ex2 = sq_ref[...] * inv_count
            var = jnp.maximum(ex2 - mean * mean, 0.0)
            rstd = lax.rsqrt(var + _EPS)
            m = mean[:, :cout]
            r = rstd[:, :cout]
            if n_t == 1:
                z = (o_ref[0] - m) * r
                o_ref[0] = jnp.where(z >= 0, z, _NEG_SLOPE * z)
            else:
                @pl.loop(0, n_t)
                def _(i):
                    s0 = pl.multiple_of(i * ts, 8)
                    z = (o_ref[0, pl.ds(s0, ts), :] - m) * r
                    o_ref[0, pl.ds(s0, ts), :] = jnp.where(
                        z >= 0, z, _NEG_SLOPE * z)

    return kernel


def _make_conv_stats_kernel(cout):
    """Two-pass fallback, pass 1: conv + per-tile stats; y stored bf16."""

    def kernel(x_ref, w_ref, m_ref, y_ref, ps_ref, pq_ref):
        x = x_ref[0]
        accf = jnp.dot(x, w_ref[...], preferred_element_type=jnp.float32)
        cp = accf.shape[1] // 2
        acc0 = accf[:, :cp]
        acc1 = accf[:, cp:]
        ts = acc0.shape[0]
        acc = acc0 + pltpu.roll(acc1, ts - 1, 0)
        acc = acc * m_ref[...]
        # Exact-Cout bf16 intermediate in HBM; stats from the f32 accumulator.
        y_ref[0] = acc[:, :cout].astype(y_ref.dtype)
        ps_ref[0, 0] = jnp.sum(acc, axis=0, keepdims=True)
        pq_ref[0, 0] = jnp.sum(acc * acc, axis=0, keepdims=True)

    return kernel


def _norm_lrelu_kernel(y_ref, mean_ref, rstd_ref, o_ref):
    """Two-pass fallback, pass 2: fused InstanceNorm + LeakyReLU."""
    z = (y_ref[0].astype(jnp.float32) - mean_ref[0]) * rstd_ref[0]
    o_ref[0] = jnp.where(z >= 0, z, _NEG_SLOPE * z)


def _choose_tile_rows(oh, row_bytes, budget_bytes):
    """Largest output-row tile TH that divides OH, is a multiple of 8 and keeps
    per-step blocks under `budget_bytes`; falls back to the whole image."""
    cap = max(8, budget_bytes // max(row_bytes, 1))
    th = min(oh, int(cap)) // 8 * 8
    while th >= 8:
        if oh % th == 0:
            return th
        th -= 8
    return oh


@functools.partial(jax.jit, static_argnames=("stride",))
def block_forward(x_nchw, weight, bias, stride=2):
    """x_nchw: (N, Cin, H, W); weight: (Cout, Cin, 4, 4); bias: (Cout,).

    `bias` is accepted for interface parity but unused: InstanceNorm (affine
    off) subtracts the per-channel mean, which cancels a per-channel constant
    exactly."""
    del bias
    if stride != 2:
        raise NotImplementedError("Block kernel is specialised to stride=2.")

    N, Cin, H, W = x_nchw.shape
    Cout, Cin2, kh, kw = weight.shape
    assert (Cin2, kh, kw) == (Cin, 4, 4)

    Hp, Wp = H + 2, W + 2
    OH = (Hp - 4) // 2 + 1
    OW = (Wp - 4) // 2 + 1
    Ws = Wp // 2                      # = OW + 1 plane columns (1 padding col)
    S = OH * Ws                       # flattened plane-spatial extent
    K8 = 8 * Cin
    Cp = ((Cout + 127) // 128) * 128  # MXU lane pad (weights only, not HBM)

    # --- tap-group operand: one NHWC transpose + 8 strided slices, all bf16.
    #     xg[n, r*Ws + c, g*Cin + ci] = xpad[n, 2*(r+di)+pi, 2*c+pj, ci]
    #     with g = (di, pi, pj) enumerated di -> pi -> pj.
    xb = jnp.transpose(x_nchw.astype(jnp.bfloat16), (0, 2, 3, 1))   # NHWC
    xpad = jnp.pad(xb, ((0, 0), (1, 1), (1, 1), (0, 0)), mode="reflect")
    groups = []
    for di in (0, 1):
        for pi in (0, 1):
            for pj in (0, 1):
                groups.append(
                    xpad[:, 2 * di + pi: 2 * di + pi + 2 * OH: 2,
                         pj: pj + 2 * Ws: 2, :])                     # (N,OH,Ws,Cin)
    xg = jnp.stack(groups, axis=3).reshape(N, S, K8)                 # bf16

    # --- weights: (di, pi, pj, ci) tap order; dj=0 / dj=1 matrices
    #     concatenated along output channels -> one 2*Cp-wide matmul.
    wmats = []
    for dj in (0, 1):
        taps = [weight[:, :, 2 * di + pi, 2 * dj + pj]
                for di in (0, 1) for pi in (0, 1) for pj in (0, 1)]  # (Cout,Cin)
        wd = jnp.transpose(jnp.stack(taps, 0), (0, 2, 1)).reshape(K8, Cout)
        wmats.append(jnp.pad(wd.astype(jnp.float32),
                             ((0, 0), (0, Cp - Cout))))
    wcat = jnp.concatenate(wmats, axis=1).astype(jnp.bfloat16)       # (K8, 2*Cp)

    # Validity mask: plane column OW is not a real output position.
    # TODO(synk): could be built in-kernel from an iota to drop this tiny
    # 1-lane input stream.
    col = jnp.arange(S, dtype=jnp.int32) % Ws
    mask = (col < OW).astype(jnp.float32).reshape(S, 1)

    # Spatial tiling (whole output rows per tile -> the roll-wrap trick holds).
    row_bytes = Ws * (2 * K8 * 2 + 2 * (2 * Cp) * 4)
    TH = _choose_tile_rows(OH, row_bytes, _TILE_BUDGET)
    TS = TH * Ws
    n_t = OH // TH
    assert TS % Ws == 0 and n_t * TS == S

    count = float(OH * OW)

    # TODO(synk): when N == 1 and n_t == 1 the grid degenerates to a single
    # parallel step and one v7x TensorCore idles; split N*n_t further if that
    # case matters.
    cparams_sp = pltpu.CompilerParams(
        dimension_semantics=("parallel", "arbitrary"),
        vmem_limit_bytes=_VMEM_LIMIT)
    cparams_pp = pltpu.CompilerParams(
        dimension_semantics=("parallel", "parallel"),
        vmem_limit_bytes=_VMEM_LIMIT)

    resident_bytes = 2 * S * Cout * 4                      # out block (2 bufs)
    per_step_bytes = (2 * TS * K8 * 2                      # xg (2 bufs)
                      + 2 * TS * (2 * Cp) * 4              # f32 accumulators
                      + K8 * (2 * Cp) * 2)                 # weights
    single_pass = resident_bytes + per_step_bytes <= _SINGLE_PASS_BUDGET

    if single_pass:
        out_flat = pl.pallas_call(
            _make_fused_kernel(n_t, TS, Cout, 1.0 / count),
            out_shape=jax.ShapeDtypeStruct((N, S, Cout), jnp.float32),
            grid_spec=pltpu.PrefetchScalarGridSpec(
                num_scalar_prefetch=0,
                grid=(N, n_t),
                in_specs=[
                    pl.BlockSpec((1, TS, K8), lambda n, t: (n, t, 0)),
                    pl.BlockSpec((K8, 2 * Cp), lambda n, t: (0, 0)),
                    pl.BlockSpec((TS, 1), lambda n, t: (t, 0)),
                ],
                out_specs=pl.BlockSpec((1, S, Cout), lambda n, t: (n, 0, 0)),
                scratch_shapes=[pltpu.VMEM((1, Cp), jnp.float32),
                                pltpu.VMEM((1, Cp), jnp.float32)],
            ),
            compiler_params=cparams_sp,
        )(xg, wcat, mask)
    else:
        # ---- pass 1: conv + per-tile statistics (bf16, exact-Cout y in HBM)
        y, psum, psumsq = pl.pallas_call(
            _make_conv_stats_kernel(Cout),
            out_shape=(
                jax.ShapeDtypeStruct((N, S, Cout), jnp.bfloat16),
                jax.ShapeDtypeStruct((N, n_t, 1, Cp), jnp.float32),
                jax.ShapeDtypeStruct((N, n_t, 1, Cp), jnp.float32),
            ),
            grid_spec=pltpu.PrefetchScalarGridSpec(
                num_scalar_prefetch=0,
                grid=(N, n_t),
                in_specs=[
                    pl.BlockSpec((1, TS, K8), lambda n, t: (n, t, 0)),
                    pl.BlockSpec((K8, 2 * Cp), lambda n, t: (0, 0)),
                    pl.BlockSpec((TS, 1), lambda n, t: (t, 0)),
                ],
                out_specs=[
                    pl.BlockSpec((1, TS, Cout), lambda n, t: (n, t, 0)),
                    pl.BlockSpec((1, 1, 1, Cp), lambda n, t: (n, t, 0, 0)),
                    pl.BlockSpec((1, 1, 1, Cp), lambda n, t: (n, t, 0, 0)),
                ],
            ),
            compiler_params=cparams_pp,
        )(xg, wcat, mask)

        # ---- tiny cross-tile reduction -> per-(n, channel) mean / rstd
        mean = jnp.sum(psum, axis=1) / count               # (N, 1, Cp)
        ex2 = jnp.sum(psumsq, axis=1) / count
        var = jnp.maximum(ex2 - mean * mean, 0.0)
        rstd = lax.rsqrt(var + _EPS)
        mean = mean[:, :, :Cout]
        rstd = rstd[:, :, :Cout]

        # ---- pass 2: fused normalize + LeakyReLU
        out_flat = pl.pallas_call(
            _norm_lrelu_kernel,
            out_shape=jax.ShapeDtypeStruct((N, S, Cout), jnp.float32),
            grid_spec=pltpu.PrefetchScalarGridSpec(
                num_scalar_prefetch=0,
                grid=(N, n_t),
                in_specs=[
                    pl.BlockSpec((1, TS, Cout), lambda n, t: (n, t, 0)),
                    pl.BlockSpec((1, 1, Cout), lambda n, t: (n, 0, 0)),
                    pl.BlockSpec((1, 1, Cout), lambda n, t: (n, 0, 0)),
                ],
                out_specs=pl.BlockSpec((1, TS, Cout), lambda n, t: (n, t, 0)),
            ),
            compiler_params=cparams_pp,
        )(y, mean, rstd)

    # Drop the plane padding column, go back to NCHW (PyTorch parity).
    out = out_flat.reshape(N, OH, Ws, Cout)[:, :, :OW, :]
    return jnp.transpose(out, (0, 3, 1, 2))


def _reference(x, weight, bias):
    """Pure-JAX reference of the PyTorch Block forward (f32)."""
    xpad = jnp.pad(x, ((0, 0), (0, 0), (1, 1), (1, 1)), mode="reflect")
    y = lax.conv_general_dilated(
        xpad, weight, window_strides=(2, 2), padding="VALID",
        dimension_numbers=("NCHW", "OIHW", "NCHW"))
    y = y + bias.reshape(1, -1, 1, 1)
    mean = jnp.mean(y, axis=(2, 3), keepdims=True)
    var = jnp.mean((y - mean) ** 2, axis=(2, 3), keepdims=True)
    z = (y - mean) * lax.rsqrt(var + _EPS)
    return jnp.where(z >= 0, z, _NEG_SLOPE * z)


if __name__ == "__main__":
    key = jax.random.PRNGKey(0)
    kx, kw, kb = jax.random.split(key, 3)

    N, Cin, H, W = 2, 4, 16, 16
    Cout = 8

    x = jax.random.normal(kx, (N, Cin, H, W), dtype=jnp.float32)
    weight = 0.1 * jax.random.normal(kw, (Cout, Cin, 4, 4), dtype=jnp.float32)
    bias = 0.1 * jax.random.normal(kb, (Cout,), dtype=jnp.float32)

    y = block_forward(x, weight, bias)
    jax.block_until_ready(y)
    assert y.shape == (N, Cout, H // 2, W // 2), y.shape

    # Loose tolerance covers bf16 MXU operands (accumulation is f32).
    ref = _reference(x, weight, bias)
    max_err = float(jnp.max(jnp.abs(y - ref)))
    assert max_err < 5e-2, f"max abs error vs reference: {max_err}"

    print("KERNEL_OK")
</pallas_src>

<mosaic_0001>
module attributes {stable_mosaic.version = 11 : i64} {
  func.func @kernel(%arg0: i32, %arg1: i32, %arg2: memref<1x72x32xbf16, #tpu.memory_space<vmem>>, %arg3: memref<32x256xbf16, #tpu.memory_space<vmem>>, %arg4: memref<72x1xf32, #tpu.memory_space<vmem>>, %arg5: memref<1x72x8xf32, #tpu.memory_space<vmem>>, %arg6: memref<1x128xf32, #tpu.memory_space<vmem>>, %arg7: memref<1x128xf32, #tpu.memory_space<vmem>>) attributes {dimension_semantics = [#tpu.dimension_semantics<parallel>, #tpu.dimension_semantics<arbitrary>], iteration_bounds = array<i64: 2, 1>, scalar_prefetch = 0 : i64, scratch_operands = 2 : i64, tpu.core_type = #tpu.core_type<tc>, window_params = [{transform_indices = @transform_0, window_bounds = array<i64: 1, 72, 32>}, {pipeline_mode = #tpu.pipeline_mode<synchronous>, transform_indices = @transform_1, window_bounds = array<i64: 32, 256>}, {transform_indices = @transform_2, window_bounds = array<i64: 72, 1>}, {transform_indices = @transform_3, window_bounds = array<i64: 1, 72, 8>}]} {
    %c0_i32 = arith.constant 0 : i32
    %0 = arith.cmpi eq, %arg1, %c0_i32 : i32
    %1 = arith.extui %0 : i1 to i32
    %c0_i32_0 = arith.constant 0 : i32
    %2 = arith.cmpi ne, %1, %c0_i32_0 : i32
    scf.if %2 {
      %cst_22 = arith.constant 0.000000e+00 : f32
      %32 = vector.broadcast %cst_22 : f32 to vector<1x128xf32>
      %c0_23 = arith.constant 0 : index
      %c0_24 = arith.constant 0 : index
      %33 = vector.load %arg6[%c0_23, %c0_24] : memref<1x128xf32, #tpu.memory_space<vmem>>, vector<1x128xf32>
      tpu.vector_store %arg6[%c0_23, %c0_24], %32 {strides = array<i32>} : memref<1x128xf32, #tpu.memory_space<vmem>>, vector<1x128xf32>,
      %cst_25 = arith.constant 0.000000e+00 : f32
      %34 = vector.broadcast %cst_25 : f32 to vector<1x128xf32>
      %c0_26 = arith.constant 0 : index
      %c0_27 = arith.constant 0 : index
      %35 = vector.load %arg7[%c0_26, %c0_27] : memref<1x128xf32, #tpu.memory_space<vmem>>, vector<1x128xf32>
      tpu.vector_store %arg7[%c0_26, %c0_27], %34 {strides = array<i32>} : memref<1x128xf32, #tpu.memory_space<vmem>>, vector<1x128xf32>,
    } else {
    }
    %c0 = arith.constant 0 : index
    %c0_1 = arith.constant 0 : index
    %c0_2 = arith.constant 0 : index
    %3 = vector.load %arg2[%c0, %c0_1, %c0_2] : memref<1x72x32xbf16, #tpu.memory_space<vmem>>, vector<1x72x32xbf16>
    %4 = vector.shape_cast %3 : vector<1x72x32xbf16> to vector<72x32xbf16>
    %c0_3 = arith.constant 0 : index
    %c0_4 = arith.constant 0 : index
    %5 = vector.load %arg3[%c0_3, %c0_4] : memref<32x256xbf16, #tpu.memory_space<vmem>>, vector<32x256xbf16>
    %cst = arith.constant dense<0.000000e+00> : vector<72x256xf32>
    %6 = tpu.matmul %4, %5, %cst {dimension_numbers = #tpu.dot_dimension_numbers<[1], [0], [0], [1], [0, 0, 1, 1], [], []>} : vector<72x32xbf16>, vector<32x256xbf16>, vector<72x256xf32> -> vector<72x256xf32>
    %7 = vector.extract_strided_slice %6 {offsets = [0, 0], sizes = [72, 128], strides = [1, 1]} : vector<72x256xf32> to vector<72x128xf32>
    %8 = vector.extract_strided_slice %6 {offsets = [0, 128], sizes = [72, 128], strides = [1, 1]} : vector<72x256xf32> to vector<72x128xf32>
    %c71_i32 = arith.constant 71 : i32
    %9 = tpu.dynamic_rotate %8 by %c71_i32 dim 0 : vector<72x128xf32>, i32 -> vector<72x128xf32>
    %10 = arith.addf %7, %9 : vector<72x128xf32>
    %c0_5 = arith.constant 0 : index
    %c0_6 = arith.constant 0 : index
    %11 = vector.load %arg4[%c0_5, %c0_6] : memref<72x1xf32, #tpu.memory_space<vmem>>, vector<72x1xf32>
    %12 = vector.broadcast %11 : vector<72x1xf32> to vector<72x128xf32>
    %13 = arith.mulf %10, %12 : vector<72x128xf32>
    %c0_7 = arith.constant 0 : index
    %c0_8 = arith.constant 0 : index
    %14 = vector.load %arg6[%c0_7, %c0_8] : memref<1x128xf32, #tpu.memory_space<vmem>>, vector<1x128xf32>
    %cst_9 = arith.constant dense<0.000000e+00> : vector<128xf32>
    %15 = vector.multi_reduction <add>, %13, %cst_9 [0] : vector<72x128xf32> to vector<128xf32>
    %16 = vector.shape_cast %15 : vector<128xf32> to vector<1x128xf32>
    %17 = arith.addf %14, %16 : vector<1x128xf32>
    %c0_10 = arith.constant 0 : index
    %c0_11 = arith.constant 0 : index
    %18 = vector.load %arg6[%c0_10, %c0_11] : memref<1x128xf32, #tpu.memory_space<vmem>>, vector<1x128xf32>
    tpu.vector_store %arg6[%c0_10, %c0_11], %17 {strides = array<i32>} : memref<1x128xf32, #tpu.memory_space<vmem>>, vector<1x128xf32>,
    %c0_12 = arith.constant 0 : index
    %c0_13 = arith.constant 0 : index
    %19 = vector.load %arg7[%c0_12, %c0_13] : memref<1x128xf32, #tpu.memory_space<vmem>>, vector<1x128xf32>
    %20 = arith.mulf %13, %13 : vector<72x128xf32>
    %cst_14 = arith.constant dense<0.000000e+00> : vector<128xf32>
    %21 = vector.multi_reduction <add>, %20, %cst_14 [0] : vector<72x128xf32> to vector<128xf32>
    %22 = vector.shape_cast %21 : vector<128xf32> to vector<1x128xf32>
    %23 = arith.addf %19, %22 : vector<1x128xf32>
    %c0_15 = arith.constant 0 : index
    %c0_16 = arith.constant 0 : index
    %24 = vector.load %arg7[%c0_15, %c0_16] : memref<1x128xf32, #tpu.memory_space<vmem>>, vector<1x128xf32>
    tpu.vector_store %arg7[%c0_15, %c0_16], %23 {strides = array<i32>} : memref<1x128xf32, #tpu.memory_space<vmem>>, vector<1x128xf32>,
    %25 = vector.extract_strided_slice %13 {offsets = [0, 0], sizes = [72, 8], strides = [1, 1]} : vector<72x128xf32> to vector<72x8xf32>
    %c0_17 = arith.constant 0 : index
    %c0_18 = arith.constant 0 : index
    %c0_19 = arith.constant 0 : index
    %26 = vector.load %arg5[%c0_17, %c0_18, %c0_19] : memref<1x72x8xf32, #tpu.memory_space<vmem>>, vector<1x72x8xf32>
    %27 = vector.shape_cast %26 : vector<1x72x8xf32> to vector<72x8xf32>
    %28 = vector.shape_cast %25 : vector<72x8xf32> to vector<1x72x8xf32>
    tpu.vector_store %arg5[%c0_17, %c0_18, %c0_19], %28 {strides = array<i32>} : memref<1x72x8xf32, #tpu.memory_space<vmem>>, vector<1x72x8xf32>,
    %c0_i32_20 = arith.constant 0 : i32
    %29 = arith.cmpi eq, %arg1, %c0_i32_20 : i32
    %30 = arith.extui %29 : i1 to i32
    %c0_i32_21 = arith.constant 0 : i32
    %31 = arith.cmpi ne, %30, %c0_i32_21 : i32
    scf.if %31 {
      %c0_22 = arith.constant 0 : index
      %c0_23 = arith.constant 0 : index
      %32 = vector.load %arg6[%c0_22, %c0_23] : memref<1x128xf32, #tpu.memory_space<vmem>>, vector<1x128xf32>
      %cst_24 = arith.constant 1.562500e-02 : f32
      %33 = vector.broadcast %cst_24 : f32 to vector<1x128xf32>
      %34 = arith.mulf %32, %33 : vector<1x128xf32>
      %c0_25 = arith.constant 0 : index
      %c0_26 = arith.constant 0 : index
      %35 = vector.load %arg7[%c0_25, %c0_26] : memref<1x128xf32, #tpu.memory_space<vmem>>, vector<1x128xf32>
      %cst_27 = arith.constant 1.562500e-02 : f32
      %36 = vector.broadcast %cst_27 : f32 to vector<1x128xf32>
      %37 = arith.mulf %35, %36 : vector<1x128xf32>
      %38 = arith.mulf %34, %34 : vector<1x128xf32>
      %39 = arith.subf %37, %38 : vector<1x128xf32>
      %cst_28 = arith.constant 0.000000e+00 : f32
      %40 = vector.broadcast %cst_28 : f32 to vector<1x128xf32>
      %41 = arith.maximumf %39, %40 : vector<1x128xf32>
      %cst_29 = arith.constant 9.99999974E-6 : f32
      %42 = vector.broadcast %cst_29 : f32 to vector<1x128xf32>
      %43 = arith.addf %41, %42 : vector<1x128xf32>
      %44 = math.rsqrt %43 : vector<1x128xf32>
      %45 = vector.extract_strided_slice %34 {offsets = [0, 0], sizes = [1, 8], strides = [1, 1]} : vector<1x128xf32> to vector<1x8xf32>
      %46 = vector.extract_strided_slice %44 {offsets = [0, 0], sizes = [1, 8], strides = [1, 1]} : vector<1x128xf32> to vector<1x8xf32>
      %c0_30 = arith.constant 0 : index
      %c0_31 = arith.constant 0 : index
      %c0_32 = arith.constant 0 : index
      %47 = vector.load %arg5[%c0_30, %c0_31, %c0_32] : memref<1x72x8xf32, #tpu.memory_space<vmem>>, vector<1x72x8xf32>
      %48 = vector.shape_cast %47 : vector<1x72x8xf32> to vector<72x8xf32>
      %49 = vector.broadcast %45 : vector<1x8xf32> to vector<72x8xf32>
      %50 = arith.subf %48, %49 : vector<72x8xf32>
      %51 = vector.broadcast %46 : vector<1x8xf32> to vector<72x8xf32>
      %52 = arith.mulf %50, %51 : vector<72x8xf32>
      %cst_33 = arith.constant 0.000000e+00 : f32
      %53 = vector.broadcast %cst_33 : f32 to vector<72x8xf32>
      %54 = arith.cmpf oge, %52, %53 : vector<72x8xf32>
      %cst_34 = arith.constant 2.000000e-01 : f32
      %55 = vector.broadcast %cst_34 : f32 to vector<72x8xf32>
      %56 = arith.mulf %55, %52 : vector<72x8xf32>
      %57 = arith.select %54, %52, %56 : vector<72x8xi1>, vector<72x8xf32>
      %c0_35 = arith.constant 0 : index
      %c0_36 = arith.constant 0 : index
      %c0_37 = arith.constant 0 : index
      %58 = vector.load %arg5[%c0_35, %c0_36, %c0_37] : memref<1x72x8xf32, #tpu.memory_space<vmem>>, vector<1x72x8xf32>
      %59 = vector.shape_cast %58 : vector<1x72x8xf32> to vector<72x8xf32>
      %60 = vector.shape_cast %57 : vector<72x8xf32> to vector<1x72x8xf32>
      tpu.vector_store %arg5[%c0_35, %c0_36, %c0_37], %60 {strides = array<i32>} : memref<1x72x8xf32, #tpu.memory_space<vmem>>, vector<1x72x8xf32>,
    } else {
    }
    return
  }
  func.func @transform_0(%arg0: i32, %arg1: i32) -> (i32, i32, i32) {
    %c0_i32 = arith.constant 0 : i32
    %c0_i32_0 = arith.constant 0 : i32
    return %arg0, %arg1, %c0_i32 : i32, i32, i32
  }
  func.func @transform_1(%arg0: i32, %arg1: i32) -> (i32, i32) {
    %c0_i32 = arith.constant 0 : i32
    %c0_i32_0 = arith.constant 0 : i32
    %c0_i32_1 = arith.constant 0 : i32
    return %c0_i32, %c0_i32_0 : i32, i32
  }
  func.func @transform_2(%arg0: i32, %arg1: i32) -> (i32, i32) {
    %c0_i32 = arith.constant 0 : i32
    %c0_i32_0 = arith.constant 0 : i32
    return %arg1, %c0_i32 : i32, i32
  }
  func.func @transform_3(%arg0: i32, %arg1: i32) -> (i32, i32, i32) {
    %c0_i32 = arith.constant 0 : i32
    %c0_i32_0 = arith.constant 0 : i32
    %c0_i32_1 = arith.constant 0 : i32
    return %arg0, %c0_i32, %c0_i32_0 : i32, i32, i32
  }
}

</mosaic_0001>

<llo_original>
// kernel: block_forward.1
$region0: #{block_forward.1}
  #allocation0 [shape = 'u32[]', space=smem, size = 0x4, offset = 0x4, fixed_abs, tag = 'smem constant byte address 0x4 - core index']
  #allocation1 [shape = 'u32[72,128]{1,0:T(1,128)}', space=vmem, size = 0x9000, scoped, tag = 'internal scratch']
  #allocation2 [shape = 'f32[1,128]{1,0:T(1,128)}', space=vmem, size = 0x200, scoped, tag = 'scratch operand']
  #allocation3 [shape = 'f32[1,128]{1,0:T(1,128)}', space=vmem, size = 0x200, scoped, tag = 'scratch operand']
  %s0 = inlined_call_operand.vmem [shape: bf16[2,72,32], index: 0, kind: input, shape index: {}]
  %s1 = inlined_call_operand.vmem [shape: bf16[32,256], index: 1, kind: input, shape index: {}]
  %s2 = inlined_call_operand.vmem [shape: f32[72,1], index: 2, kind: input, shape index: {}]
  %s3 = inlined_call_operand.vmem [shape: f32[2,72,8], index: 3, kind: output, shape index: {}]
  %s4 = sld [smem:[#allocation0]]
  $region53: #{block_forward.1} parent=0
    _
  %s6 = ssub.s32 1, %s4
  %s7 = scalar_select 0, %s6, %s4
  loop: start=0, step=1, limit=4
  $region2: #{block_forward.1} parent=0 // loop_pre_header
    _
  $region3: #{block_forward.1} parent=0 // loop_header
    %s9 = sphi 0, %s13
    %p10 = scmp.ge.s32.totalorder %s9, 4
    %s16 = sphi 0, %s28
    %s17 = sphi 0, %s24
    %s18 = sphi 0, %s16
    %s19 = sphi 0, %s17
    %s20 = sphi 0, %s18
    %s21 = sphi 0, %s19
    %s33 = sphi 0, %s35
    %s36 = sphi 0, %s33
    %s37 = sphi 0, %s36
    %s53 = sphi 0, %s37
    %s57 = sphi 0, %s57
    %s59 = sphi 0, %s57
    %s60 = sphi 0, %s59
    %s74 = sphi 0, %s60
    %s80 = sphi 0, %s82
    %s83 = sphi 0, %s80
    %s84 = sphi 0, %s83
    %s100 = sphi 0, %s84
    %s106 = sphi 0, %s108
    %s109 = sphi 0, %s106
    %s110 = sphi 0, %s109
    %s126 = sphi 0, %s110
  $region4: #{block_forward.1} parent=0 // loop_header_branch
    %12 = sbr.rel (%p10) target = $region8
  $region5: #{block_forward.1} parent=0 // loop_body
    %s14 = ssub.s32 %s9, 1
    %s15 = ssub.s32 %s9, 2
    %s22 = sadd.s32 1, %s17
    %p23 = scmp.ge.s32.totalorder %s22, 1
    %s24 = scalar_select %p23, 0, %s22
    %s25 = sadd.s32 1, %s16
    %s26 = scalar_select %p23, %s25, %s16
    %p27 = scmp.ge.s32.totalorder %s26, 2
    %s28 = scalar_select %p27, 0, %s26
    %s29 = ssub.s32 %s16, %s28
    %s30 = ssub.s32 %s17, %s24
    %s31 = sor.u32 %s29, %s30
    %p32 = scmp.eq.s32.totalorder %s31, 0
    %s34 = sadd.s32 %s33, 1
    %s35 = scalar_select %p32, %s33, %s34
    %p38 = pneg %p32
    %p39 = scmp.eq.s32.totalorder %s9, 1
    %p40 = por %p38, %p39
    %p41 = scmp.ne.s32.totalorder %s33, %s36
    %p42 = scmp.eq.s32.totalorder %s9, 0
    %p43 = por %p41, %p42
    %p44 = scmp.ne.s32.totalorder %s33, %s36
    %p45 = scmp.eq.s32.totalorder %s14, 1
    %p46 = por %p44, %p45
    %p47 = scmp.ne.s32.totalorder %s36, %s37
    %p48 = scmp.eq.s32.totalorder %s14, 0
    %p49 = por %p47, %p48
    %p50 = scmp.ne.s32.totalorder %s36, %s37
    %p51 = scmp.eq.s32.totalorder %s15, 1
    %p52 = por %p50, %p51
    %p54 = scmp.ne.s32.totalorder %s37, %s53
    %p55 = scmp.eq.s32.totalorder %s15, 0
    %p56 = por %p54, %p55
    %s58 = sadd.s32 %s57, 1
    %p61 = scmp.eq.s32.totalorder %s9, 1
    %p62 = scmp.ne.s32.totalorder %s57, %s59
    %p63 = scmp.eq.s32.totalorder %s9, 0
    %p64 = por %p62, %p63
    %p65 = scmp.ne.s32.totalorder %s57, %s59
    %p66 = scmp.eq.s32.totalorder %s14, 1
    %p67 = por %p65, %p66
    %p68 = scmp.ne.s32.totalorder %s59, %s60
    %p69 = scmp.eq.s32.totalorder %s14, 0
    %p70 = por %p68, %p69
    %p71 = scmp.ne.s32.totalorder %s59, %s60
    %p72 = scmp.eq.s32.totalorder %s15, 1
    %p73 = por %p71, %p72
    %p75 = scmp.ne.s32.totalorder %s60, %s74
    %p76 = scmp.eq.s32.totalorder %s15, 0
    %p77 = por %p75, %p76
    %s78 = ssub.s32 %s17, %s24
    %p79 = scmp.eq.s32.totalorder %s78, 0
    %s81 = sadd.s32 %s80, 1
    %s82 = scalar_select %p79, %s80, %s81
    %p85 = pneg %p79
    %p86 = scmp.eq.s32.totalorder %s9, 1
    %p87 = por %p85, %p86
    %p88 = scmp.ne.s32.totalorder %s80, %s83
    %p89 = scmp.eq.s32.totalorder %s9, 0
    %p90 = por %p88, %p89
    %p91 = scmp.ne.s32.totalorder %s80, %s83
    %p92 = scmp.eq.s32.totalorder %s14, 1
    %p93 = por %p91, %p92
    %p94 = scmp.ne.s32.totalorder %s83, %s84
    %p95 = scmp.eq.s32.totalorder %s14, 0
    %p96 = por %p94, %p95
    %p97 = scmp.ne.s32.totalorder %s83, %s84
    %p98 = scmp.eq.s32.totalorder %s15, 1
    %p99 = por %p97, %p98
    %p101 = scmp.ne.s32.totalorder %s84, %s100
    %p102 = scmp.eq.s32.totalorder %s15, 0
    %p103 = por %p101, %p102
    %s104 = ssub.s32 %s16, %s28
    %p105 = scmp.eq.s32.totalorder %s104, 0
    %s107 = sadd.s32 %s106, 1
    %s108 = scalar_select %p105, %s106, %s107
    %p111 = pneg %p105
    %p112 = scmp.eq.s32.totalorder %s9, 1
    %p113 = por %p111, %p112
    %p114 = scmp.ne.s32.totalorder %s106, %s109
    %p115 = scmp.eq.s32.totalorder %s9, 0
    %p116 = por %p114, %p115
    %p117 = scmp.ne.s32.totalorder %s106, %s109
    %p118 = scmp.eq.s32.totalorder %s14, 1
    %p119 = por %p117, %p118
    %p120 = scmp.ne.s32.totalorder %s109, %s110
    %p121 = scmp.eq.s32.totalorder %s14, 0
    %p122 = por %p120, %p121
    %p123 = scmp.ne.s32.totalorder %s109, %s110
    %p124 = scmp.eq.s32.totalorder %s15, 1
    %p125 = por %p123, %p124
    %p127 = scmp.ne.s32.totalorder %s110, %s126
    %p128 = scmp.eq.s32.totalorder %s15, 0
    %p129 = por %p127, %p128
    %p130 = scmp.le.s32.totalorder 1, %s9
    %p131 = scmp.lt.s32.totalorder %s9, 3
    %p132 = pnand %p130, %p131
    %p133 = pneg %p132
    // Predicated region
    $region9: #{block_forward.1} parent=5 // pred_check
      _
    $region10: #{block_forward.1} parent=5 // pred_check_branch
      %135 = sbr.rel (%p132) target = $region12
    $region11: #{block_forward.1} parent=5 // pred_region
      %s136 = ssub.s32 %s9, 1
      // Predicated region
      $region13: #{block_forward.1} parent=11 // pred_check
        %p137 = pneg %p70
      $region14: #{block_forward.1} parent=11 // pred_check_branch
        %139 = sbr.rel (%p137) target = $region16
      $region15: #{block_forward.1} parent=11 // pred_region
        _
      $region16: #{block_forward.1} parent=11 // pred_fallthru
        _
      // Predicated region
      $region17: #{block_forward.1} parent=11 // pred_check
        %p140 = pneg %p96
      $region18: #{block_forward.1} parent=11 // pred_check_branch
        %142 = sbr.rel (%p140) target = $region20
      $region19: #{block_forward.1} parent=11 // pred_region
        %s143 = smul.u32 9, %s19
        %p144 = scmp.lt.s32.totalorder %s143, 8
        %s145 = scalar_select %p144, %s143, 8
        %s146 = smul.addr %s145, 8
        %s147 = scalar_lea.vmem %s2, %s146
        %s148 = smul.u32 9, %s19
      $region20: #{block_forward.1} parent=11 // pred_fallthru
        _
    $region12: #{block_forward.1} parent=5 // pred_fallthru
      _
    %p149 = scmp.lt.s32.totalorder %s9, 2
    // Predicated region
    $region21: #{block_forward.1} parent=5 // pred_check
      %p150 = pneg %p149
    $region22: #{block_forward.1} parent=5 // pred_check_branch
      %152 = sbr.rel (%p150) target = $region24
    $region23: #{block_forward.1} parent=5 // pred_region
      // Predicated region
      $region25: #{block_forward.1} parent=23 // pred_check
        %p153 = pneg %p43
      $region26: #{block_forward.1} parent=23 // pred_check_branch
        %155 = sbr.rel (%p153) target = $region28
      $region27: #{block_forward.1} parent=23 // pred_region
        %s156 = smul.u32 9, %s17
        %p157 = scmp.lt.s32.totalorder %s16, 1
        %s158 = scalar_select %p157, %s16, 1
        %p159 = scmp.lt.s32.totalorder %s156, 8
        %s160 = scalar_select %p159, %s156, 8
        %s161 = smul.addr %s158, 9
        %s162 = sadd.s32 %s160, %s161
        %s163 = smul.addr %s162, 4
        %s164 = scalar_lea.vmem %s0, %s163
        %s165 = smul.u32 9, %s17
      $region28: #{block_forward.1} parent=23 // pred_fallthru
        _
    $region24: #{block_forward.1} parent=5 // pred_fallthru
      _
    %p166 = scmp.le.s32.totalorder 1, %s9
    %p167 = scmp.lt.s32.totalorder %s9, 3
    %p168 = pnand %p166, %p167
    %p169 = pneg %p168
    // Predicated region
    $region29: #{block_forward.1} parent=5 // pred_check
      _
    $region30: #{block_forward.1} parent=5 // pred_check_branch
      %171 = sbr.rel (%p168) target = $region32
    $region31: #{block_forward.1} parent=5 // pred_region
      %s172 = ssub.s32 %s9, 1
      %s173 = smul.u32 9, %s19
      %p174 = scmp.lt.s32.totalorder %s18, 1
      %s175 = scalar_select %p174, %s18, 1
      %p176 = scmp.lt.s32.totalorder %s173, 8
      %s177 = scalar_select %p176, %s173, 8
      %s178 = smul.addr %s175, 9
      %s179 = sadd.s32 %s177, %s178
      %s180 = smul.addr %s179, 4
      %s181 = scalar_lea.vmem %s0, %s180
      %p182 = pneg %p49
      %p183 = pneg %p46
      %p184 = pneg %p70
      %p185 = pneg %p67
      %s186 = smul.u32 9, %s19
      %p187 = scmp.lt.s32.totalorder %s186, 8
      %s188 = scalar_select %p187, %s186, 8
      %s189 = smul.addr %s188, 8
      %s190 = scalar_lea.vmem %s2, %s189
      %p191 = pneg %p96
      %p192 = pneg %p93
      %p193 = pneg %p122
      %p194 = pneg %p119
      %p195 = scmp.lt.s32.totalorder %s18, 1
      %s196 = scalar_select %p195, %s18, 1
      %s197 = smul.addr %s196, 9
      %s198 = smul.addr %s197, 8
      %s199 = scalar_lea.vmem %s3, %s198
      %s200 = smul.u32 9, %s19
      %p201 = scmp.lt.s32.totalorder %s18, 1
      %s202 = scalar_select %p201, %s18, 1
      %p203 = scmp.lt.s32.totalorder %s200, 8
      %s204 = scalar_select %p203, %s200, 8
      %s205 = smul.addr %s202, 9
      %s206 = sadd.s32 %s204, %s205
      %s207 = smul.addr %s206, 4
      %s208 = scalar_lea.vmem %s0, %s207
      %s209 = smul.u32 9, %s19
      %s210 = smul.u32 9, %s19
      %p211 = scmp.lt.s32.totalorder %s210, 8
      %s212 = scalar_select %p211, %s210, 8
      %s213 = smul.addr %s212, 8
      %s214 = scalar_lea.vmem %s2, %s213
      %s215 = smul.u32 9, %s19
      %p216 = scmp.lt.s32.totalorder %s18, 1
      %s217 = scalar_select %p216, %s18, 1
      %s218 = smul.addr %s217, 9
      %s219 = smul.addr %s218, 8
      %s220 = scalar_lea.vmem %s3, %s219
      %p222 = scmp.eq.s32.totalorder %s19, 0
      // Predicated region
      $region33: #{block_forward.1} parent=31 // pred_check
        %p223 = pneg %p222
      $region34: #{block_forward.1} parent=31 // pred_check_branch
        %225 = sbr.rel (%p223) target = $region36
      $region35: #{block_forward.1} parent=31 // pred_region
        %226 = vst [vmem:[#allocation2] sm:$0x1] 0.0
        %227 = vst [vmem:[#allocation3] sm:$0x1] 0.0
      $region36: #{block_forward.1} parent=31 // pred_fallthru
        _
      %v228 = vld [vmem:[%s208] sm:$0xf]
      %v229 = vld [vmem:[%s208 + $0x4] sm:$0xf]
      %v230 = vld [vmem:[%s208 + $0x8] sm:$0xf]
      %v231 = vld [vmem:[%s208 + $0xc] sm:$0xf]
      %v232 = vld [vmem:[%s208 + $0x10] sm:$0xf]
      %v233 = vld [vmem:[%s208 + $0x14] sm:$0xf]
      %v234 = vld [vmem:[%s208 + $0x18] sm:$0xf]
      %v235 = vld [vmem:[%s208 + $0x1c] sm:$0xf]
      %v236 = vld [vmem:[%s208 + $0x20] sm:$0xf]
      %v237 = vld [vmem:[%s1] sm:$0xff]
      %v238 = vld [vmem:[%s1 + $0x8] sm:$0xff]
      %v239 = vld [vmem:[%s1 + $0x10] sm:$0xff]
      %v240 = vld [vmem:[%s1 + $0x18] sm:$0xff]
      %v250 = vunpack.c.l.b16 %v228
      %v251 = vunpack.c.l.b16 %v229
      %v252 = vunpack.c.l.b16 %v230
      %v253 = vunpack.c.l.b16 %v231
      %v254 = vunpack.c.l.b16 %v232
      %v255 = vunpack.c.l.b16 %v233
      %v256 = vunpack.c.l.b16 %v234
      %v257 = vunpack.c.l.b16 %v235
      %v258 = vunpack.c.l.b16 %v236
      %v259 = vpack.c.b16 %v251, %v250
      %v260 = vpack.c.b16 %v253, %v252
      %v261 = vpack.c.b16 %v255, %v254
      %v262 = vpack.c.b16 %v257, %v256
      %v263 = vpack.c.b16 %v258, %v258
      %v268 = vunpack.c.l.b16 %v237
      %v269 = vunpack.c.h.b16 %v237
      %v270 = vunpack.c.l.b16 %v238
      %v271 = vunpack.c.h.b16 %v238
      %v272 = vunpack.c.l.b16 %v239
      %v273 = vunpack.c.h.b16 %v239
      %v274 = vunpack.c.l.b16 %v240
      %v275 = vunpack.c.h.b16 %v240
      %v276 = vpack.c.b16 %v270, %v268
      %v277 = vpack.c.b16 %v271, %v269
      %v278 = vpack.c.b16 %v274, %v272
      %v279 = vpack.c.b16 %v275, %v273
      %vm284 = vcmask 261120
      %v286 = vsel %vm284, %v259, 0
      %v289 = vsel %vm284, %v260, 0
      %v292 = vsel %vm284, %v261, 0
      %v295 = vsel %vm284, %v262, 0
      %v298 = vsel %vm284, %v263, 0
      %300 = vmatpush.bf16.msra.mxu0 0
      %301 = vmatpush.bf16.msra.mxu0 0
      %302 = vmatpush.bf16.msra.mxu0 0
      %303 = vmatpush.bf16.msra.mxu0 0
      %304 = vmatpush.bf16.msra.mxu0 0
      %305 = vmatpush.bf16.msra.mxu0 0
      %306 = vmatpush.bf16.msra.mxu0 %v278
      %307 = vmatpush.bf16.msra.mxu0 %v276
      %308 = vmatmul.bf16.gmra.mxu0 %v286
      %v309 = vpop.f32.mrf.mxu0
      %v310 = vadd.f32 0.0, %v309
      %v311 = vpop.f32.mrf.mxu0
      %v312 = vadd.f32 0.0, %v311
      %313 = vmatmul.bf16.gmra.mxu0 %v289
      %v314 = vpop.f32.mrf.mxu0
      %v315 = vadd.f32 0.0, %v314
      %v316 = vpop.f32.mrf.mxu0
      %v317 = vadd.f32 0.0, %v316
      %318 = vmatmul.bf16.gmra.mxu0 %v292
      %v319 = vpop.f32.mrf.mxu0
      %v320 = vadd.f32 0.0, %v319
      %v321 = vpop.f32.mrf.mxu0
      %v322 = vadd.f32 0.0, %v321
      %323 = vmatmul.bf16.gmra.mxu0 %v295
      %v324 = vpop.f32.mrf.mxu0
      %v325 = vadd.f32 0.0, %v324
      %v326 = vpop.f32.mrf.mxu0
      %v327 = vadd.f32 0.0, %v326
      %328 = vmatmul.bf16.gmra.mxu0 %v298
      %v329 = vpop.f32.mrf.mxu0
      %v330 = vadd.f32 0.0, %v329
      %v331 = vpop.f32.mrf.mxu0
      %332 = vdwg.mxu0
      %333 = vmatpush.bf16.msra.mxu0 0
      %334 = vmatpush.bf16.msra.mxu0 0
      %335 = vmatpush.bf16.msra.mxu0 0
      %336 = vmatpush.bf16.msra.mxu0 0
      %337 = vmatpush.bf16.msra.mxu0 0
      %338 = vmatpush.bf16.msra.mxu0 0
      %339 = vmatpush.bf16.msra.mxu0 %v279
      %340 = vmatpush.bf16.msra.mxu0 %v277
      %341 = vmatmul.bf16.gmra.mxu0 %v286
      %v342 = vpop.f32.mrf.mxu0
      %v343 = vadd.f32 0.0, %v342
      %v344 = vpop.f32.mrf.mxu0
      %v345 = vadd.f32 0.0, %v344
      %346 = vmatmul.bf16.gmra.mxu0 %v289
      %v347 = vpop.f32.mrf.mxu0
      %v348 = vadd.f32 0.0, %v347
      %v349 = vpop.f32.mrf.mxu0
      %v350 = vadd.f32 0.0, %v349
      %351 = vmatmul.bf16.gmra.mxu0 %v292
      %v352 = vpop.f32.mrf.mxu0
      %v353 = vadd.f32 0.0, %v352
      %v354 = vpop.f32.mrf.mxu0
      %v355 = vadd.f32 0.0, %v354
      %356 = vmatmul.bf16.gmra.mxu0 %v295
      %v357 = vpop.f32.mrf.mxu0
      %v358 = vadd.f32 0.0, %v357
      %v359 = vpop.f32.mrf.mxu0
      %v360 = vadd.f32 0.0, %v359
      %361 = vmatmul.bf16.gmra.mxu0 %v298
      %v362 = vpop.f32.mrf.mxu0
      %v363 = vadd.f32 0.0, %v362
      %v364 = vpop.f32.mrf.mxu0
      %365 = vdwg.mxu0
      %v366 = vrot.slane %v343, 1
      %v367 = vrot.slane %v345, 1
      %v368 = vrot.slane %v348, 1
      %v369 = vrot.slane %v350, 1
      %v370 = vrot.slane %v353, 1
      %v371 = vrot.slane %v355, 1
      %v372 = vrot.slane %v358, 1
      %v373 = vrot.slane %v360, 1
      %v374 = vrot.slane %v363, 1
      %v375 = vlaneseq
      %v376 = vshrl.u32 %v375, 7
      %vm377 = vcmp.lt.s32.totalorder %v376, 7
      %v378 = vsel %vm377, %v373, %v374
      %v379 = vsel %vm377, %v372, %v373
      %v380 = vsel %vm377, %v371, %v372
      %v381 = vsel %vm377, %v370, %v371
      %v382 = vsel %vm377, %v369, %v370
      %v383 = vsel %vm377, %v368, %v369
      %v384 = vsel %vm377, %v367, %v368
      %v385 = vsel %vm377, %v366, %v367
      %v386 = vsel %vm377, %v374, %v366
      %v387 = vadd.f32 %v310, %v385
      %v388 = vadd.f32 %v312, %v384
      %v389 = vadd.f32 %v315, %v383
      %v390 = vadd.f32 %v317, %v382
      %v391 = vadd.f32 %v320, %v381
      %v392 = vadd.f32 %v322, %v380
      %v393 = vadd.f32 %v325, %v379
      %v394 = vadd.f32 %v327, %v378
      %v395 = vadd.f32 %v330, %v386
      %v396 = vld [vmem:[%s214] sm:$0xff]
      %v397 = vld [vmem:[%s214 + $0x8] sm:$0xff]
      %v398 = vld [vmem:[%s214 + $0x10] sm:$0xff]
      %v399 = vld [vmem:[%s214 + $0x18] sm:$0xff]
      %v400 = vld [vmem:[%s214 + $0x20] sm:$0xff]
      %v401 = vld [vmem:[%s214 + $0x28] sm:$0xff]
      %v402 = vld [vmem:[%s214 + $0x30] sm:$0xff]
      %v403 = vld [vmem:[%s214 + $0x38] sm:$0xff]
      %v404 = vld [vmem:[%s214 + $0x40] sm:$0xff]
      %406 = vset.pattern.permute.xlu0 0
      %407 = vperm.xlu0 %406, %v396
      %v408 = vpop.permute.xlu0 %407
      %411 = vset.pattern.permute.xlu0 0
      %412 = vperm.xlu0 %411, %v397
      %v413 = vpop.permute.xlu0 %412
      %416 = vset.pattern.permute.xlu0 0
      %417 = vperm.xlu0 %416, %v398
      %v418 = vpop.permute.xlu0 %417
      %421 = vset.pattern.permute.xlu0 0
      %422 = vperm.xlu0 %421, %v399
      %v423 = vpop.permute.xlu0 %422
      %426 = vset.pattern.permute.xlu0 0
      %427 = vperm.xlu0 %426, %v400
      %v428 = vpop.permute.xlu0 %427
      %431 = vset.pattern.permute.xlu0 0
      %432 = vperm.xlu0 %431, %v401
      %v433 = vpop.permute.xlu0 %432
      %436 = vset.pattern.permute.xlu0 0
      %437 = vperm.xlu0 %436, %v402
      %v438 = vpop.permute.xlu0 %437
      %441 = vset.pattern.permute.xlu0 0
      %442 = vperm.xlu0 %441, %v403
      %v443 = vpop.permute.xlu0 %442
      %446 = vset.pattern.permute.xlu0 0
      %447 = vperm.xlu0 %446, %v404
      %v448 = vpop.permute.xlu0 %447
      %v450 = vmul.f32 %v387, %v408
      %v451 = vmul.f32 %v388, %v413
      %v452 = vmul.f32 %v389, %v418
      %v453 = vmul.f32 %v390, %v423
      %v454 = vmul.f32 %v391, %v428
      %v455 = vmul.f32 %v392, %v433
      %v456 = vmul.f32 %v393, %v438
      %v457 = vmul.f32 %v394, %v443
      %v458 = vmul.f32 %v395, %v448
      %v459 = vld [vmem:[#allocation2] sm:$0x1]
      %v460 = vadd.f32 %v450, %v451
      %v461 = vadd.f32 %v460, %v452
      %v462 = vadd.f32 %v461, %v453
      %v463 = vadd.f32 %v462, %v454
      %v464 = vadd.f32 %v463, %v455
      %v465 = vadd.f32 %v464, %v456
      %v466 = vadd.f32 %v465, %v457
      %v467 = vadd.f32 %v466, %v458
      %v468 = vrot.slane %v467, 4
      %v469 = vadd.f32 %v467, %v468
      %v470 = vrot.slane %v469, 2
      %v471 = vadd.f32 %v469, %v470
      %v472 = vrot.slane %v471, 1
      %v473 = vadd.f32 %v471, %v472
      %v474 = vadd.f32 %v459, %v473
      %475 = vst [vmem:[#allocation2] sm:$0x1] %v474
      %v476 = vld [vmem:[#allocation3] sm:$0x1]
      %v477 = vmul.f32 %v450, %v450
      %v478 = vmul.f32 %v451, %v451
      %v479 = vmul.f32 %v452, %v452
      %v480 = vmul.f32 %v453, %v453
      %v481 = vmul.f32 %v454, %v454
      %v482 = vmul.f32 %v455, %v455
      %v483 = vmul.f32 %v456, %v456
      %v484 = vmul.f32 %v457, %v457
      %v485 = vmul.f32 %v458, %v458
      %v486 = vadd.f32 %v477, %v478
      %v487 = vadd.f32 %v486, %v479
      %v488 = vadd.f32 %v487, %v480
      %v489 = vadd.f32 %v488, %v481
      %v490 = vadd.f32 %v489, %v482
      %v491 = vadd.f32 %v490, %v483
      %v492 = vadd.f32 %v491, %v484
      %v493 = vadd.f32 %v492, %v485
      %v494 = vrot.slane %v493, 4
      %v495 = vadd.f32 %v493, %v494
      %v496 = vrot.slane %v495, 2
      %v497 = vadd.f32 %v495, %v496
      %v498 = vrot.slane %v497, 1
      %v499 = vadd.f32 %v497, %v498
      %v500 = vadd.f32 %v476, %v499
      %501 = vst [vmem:[#allocation3] sm:$0x1] %v500
      %vm502 = vcmask 64512
      %503 = vst.msk [vmem:[%s220] sm:$0xff] %vm502, %v450
      %504 = vst.msk [vmem:[%s220 + $0x8] sm:$0xff] %vm502, %v451
      %505 = vst.msk [vmem:[%s220 + $0x10] sm:$0xff] %vm502, %v452
      %506 = vst.msk [vmem:[%s220 + $0x18] sm:$0xff] %vm502, %v453
      %507 = vst.msk [vmem:[%s220 + $0x20] sm:$0xff] %vm502, %v454
      %508 = vst.msk [vmem:[%s220 + $0x28] sm:$0xff] %vm502, %v455
      %509 = vst.msk [vmem:[%s220 + $0x30] sm:$0xff] %vm502, %v456
      %510 = vst.msk [vmem:[%s220 + $0x38] sm:$0xff] %vm502, %v457
      %511 = vst.msk [vmem:[%s220 + $0x40] sm:$0xff] %vm502, %v458
      // Predicated region
      $region37: #{block_forward.1} parent=31 // pred_check
        %p512 = pneg %p222
      $region38: #{block_forward.1} parent=31 // pred_check_branch
        %514 = sbr.rel (%p512) target = $region40
      $region39: #{block_forward.1} parent=31 // pred_region
        %v515 = vld [vmem:[#allocation2] sm:$0x1]
        %v516 = vmul.f32 %v515, 0.015625
        %v517 = vld [vmem:[#allocation3] sm:$0x1]
        %v518 = vmul.f32 %v517, 0.015625
        %v519 = vmul.f32 %v516, %v516
        %v520 = vsub.f32 %v518, %v519
        %v521 = vmax.f32 %v520, 0.0
        %v522 = vadd.f32 %v521, 1e-05
        %v523 = vrsqrt.pop %v522
        %v524 = vmul.f32 %v523, %v522
        %v525 = vmul.f32 %v524, %v523
        %v526 = vmul.f32 0.5, %v525
        %v527 = vsub.f32 1.5, %v526
        %v528 = vmul.f32 %v523, %v527
        %vm529 = vweird.f32 %v522
        %vm530 = vweird.f32 %v523
        %vm531 = vmor %vm529, %vm530
        %v532 = vsel %vm531, %v523, %v528
        %v533 = vld [vmem:[%s220] sm:$0xff]
        %v534 = vld [vmem:[%s220 + $0x8] sm:$0xff]
        %v535 = vld [vmem:[%s220 + $0x10] sm:$0xff]
        %v536 = vld [vmem:[%s220 + $0x18] sm:$0xff]
        %v537 = vld [vmem:[%s220 + $0x20] sm:$0xff]
        %v538 = vld [vmem:[%s220 + $0x28] sm:$0xff]
        %v539 = vld [vmem:[%s220 + $0x30] sm:$0xff]
        %v540 = vld [vmem:[%s220 + $0x38] sm:$0xff]
        %v541 = vld [vmem:[%s220 + $0x40] sm:$0xff]
        %v543 = vperm.slane %v516, 0
        %v545 = vsub.f32 %v533, %v543
        %v546 = vsub.f32 %v534, %v543
        %v547 = vsub.f32 %v535, %v543
        %v548 = vsub.f32 %v536, %v543
        %v549 = vsub.f32 %v537, %v543
        %v550 = vsub.f32 %v538, %v543
        %v551 = vsub.f32 %v539, %v543
        %v552 = vsub.f32 %v540, %v543
        %v553 = vsub.f32 %v541, %v543
        %v555 = vperm.slane %v532, 0
        %v557 = vmul.f32 %v545, %v555
        %v558 = vmul.f32 %v546, %v555
        %v559 = vmul.f32 %v547, %v555
        %v560 = vmul.f32 %v548, %v555
        %v561 = vmul.f32 %v549, %v555
        %v562 = vmul.f32 %v550, %v555
        %v563 = vmul.f32 %v551, %v555
        %v564 = vmul.f32 %v552, %v555
        %v565 = vmul.f32 %v553, %v555
        %vm566 = vcmp.ge.f32.partialorder %v557, 0.0
        %vm567 = vcmp.ge.f32.partialorder %v558, 0.0
        %vm568 = vcmp.ge.f32.partialorder %v559, 0.0
        %vm569 = vcmp.ge.f32.partialorder %v560, 0.0
        %vm570 = vcmp.ge.f32.partialorder %v561, 0.0
        %vm571 = vcmp.ge.f32.partialorder %v562, 0.0
        %vm572 = vcmp.ge.f32.partialorder %v563, 0.0
        %vm573 = vcmp.ge.f32.partialorder %v564, 0.0
        %vm574 = vcmp.ge.f32.partialorder %v565, 0.0
        %v575 = vmul.f32 %v557, 0.2
        %v576 = vmul.f32 %v558, 0.2
        %v577 = vmul.f32 %v559, 0.2
        %v578 = vmul.f32 %v560, 0.2
        %v579 = vmul.f32 %v561, 0.2
        %v580 = vmul.f32 %v562, 0.2
        %v581 = vmul.f32 %v563, 0.2
        %v582 = vmul.f32 %v564, 0.2
        %v583 = vmul.f32 %v565, 0.2
        %v584 = vsel %vm566, %v557, %v575
        %v585 = vsel %vm567, %v558, %v576
        %v586 = vsel %vm568, %v559, %v577
        %v587 = vsel %vm569, %v560, %v578
        %v588 = vsel %vm570, %v561, %v579
        %v589 = vsel %vm571, %v562, %v580
        %v590 = vsel %vm572, %v563, %v581
        %v591 = vsel %vm573, %v564, %v582
        %v592 = vsel %vm574, %v565, %v583
        %593 = vst.msk [vmem:[%s220] sm:$0xff] %vm502, %v584
        %594 = vst.msk [vmem:[%s220 + $0x8] sm:$0xff] %vm502, %v585
        %595 = vst.msk [vmem:[%s220 + $0x10] sm:$0xff] %vm502, %v586
        %596 = vst.msk [vmem:[%s220 + $0x18] sm:$0xff] %vm502, %v587
        %597 = vst.msk [vmem:[%s220 + $0x20] sm:$0xff] %vm502, %v588
        %598 = vst.msk [vmem:[%s220 + $0x28] sm:$0xff] %vm502, %v589
        %599 = vst.msk [vmem:[%s220 + $0x30] sm:$0xff] %vm502, %v590
        %600 = vst.msk [vmem:[%s220 + $0x38] sm:$0xff] %vm502, %v591
        %601 = vst.msk [vmem:[%s220 + $0x40] sm:$0xff] %vm502, %v592
      $region40: #{block_forward.1} parent=31 // pred_fallthru
        _
      %p602 = scmp.lt.s32.totalorder %s18, 1
      %s603 = scalar_select %p602, %s18, 1
      %s604 = smul.addr %s603, 9
      %s605 = smul.addr %s604, 8
      %s606 = scalar_lea.vmem %s3, %s605
      // Predicated region
      $region41: #{block_forward.1} parent=31 // pred_check
        %p607 = pneg %p119
      $region42: #{block_forward.1} parent=31 // pred_check_branch
        %609 = sbr.rel (%p607) target = $region44
      $region43: #{block_forward.1} parent=31 // pred_region
        _
      $region44: #{block_forward.1} parent=31 // pred_fallthru
        _
    $region32: #{block_forward.1} parent=5 // pred_fallthru
      _
    %p610 = scmp.le.s32.totalorder 2, %s9
    // Predicated region
    $region45: #{block_forward.1} parent=5 // pred_check
      %p611 = pneg %p610
    $region46: #{block_forward.1} parent=5 // pred_check_branch
      %613 = sbr.rel (%p611) target = $region48
    $region47: #{block_forward.1} parent=5 // pred_region
      %s614 = ssub.s32 %s9, 2
      // Predicated region
      $region49: #{block_forward.1} parent=47 // pred_check
        %p615 = pneg %p125
      $region50: #{block_forward.1} parent=47 // pred_check_branch
        %617 = sbr.rel (%p615) target = $region52
      $region51: #{block_forward.1} parent=47 // pred_region
        %p618 = scmp.lt.s32.totalorder %s20, 1
        %s619 = scalar_select %p618, %s20, 1
        %s620 = smul.addr %s619, 9
        %s621 = smul.addr %s620, 8
        %s622 = scalar_lea.vmem %s3, %s621
      $region52: #{block_forward.1} parent=47 // pred_fallthru
        _
    $region48: #{block_forward.1} parent=5 // pred_fallthru
      _
  $region6: #{block_forward.1} parent=0 // loop_footer
    %s13 = sadd.s32 1, %s9
  $region7: #{block_forward.1} parent=0 // loop_footer_branch
    %8 = sbr.rel target = $region3
  $region8: #{block_forward.1} parent=0 // loop_exit
    _

</llo_original>
